<compile_context>
chip_gen: v7x
topology: tpu7x:2x2x1
jax: 0.10.0
libtpu: 0.0.40
codegen_flags: <defaults>
</compile_context>

<pallas_src>
import functools

import jax
import jax.numpy as jnp
from jax.experimental import pallas as pl
from jax.experimental.pallas import tpu as pltpu


def _round_up(x, m):
    return ((x + m - 1) // m) * m


def _autoencoder_kernel(x_ref, we_ref, be_ref, wd_ref, bd_ref, out_ref):
    # x_ref:  [TM, D]      input tile, f32 in HBM (cast to MXU dtype in-kernel)
    # we_ref: [D, HID_P]   encoder weight (bf16), VMEM-resident across grid steps
    # be_ref: [1, HID_P]   encoder bias (f32)
    # wd_ref: [HID_P, D]   decoder weight (bf16), VMEM-resident
    # bd_ref: [1, D]       decoder bias (f32)
    # out_ref:[TM, D]      reconstruction tile
    x = x_ref[...].astype(we_ref.dtype)          # cheap VPU cast, no extra HBM pass

    # ---- encoder: Linear + ReLU (MXU matmul, f32 accumulate; VPU ops in f32) ----
    h = jnp.dot(x, we_ref[...], preferred_element_type=jnp.float32)
    h = jnp.maximum(h + be_ref[...], 0.0)

    # ---- decoder: Linear + Sigmoid ----
    y = jnp.dot(h.astype(wd_ref.dtype), wd_ref[...],
                preferred_element_type=jnp.float32)
    y = y + bd_ref[...]
    # sigmoid(y) = 1 / (1 + exp(-y)); exp and approx reciprocal both run on the EUP
    # slot, keeping the vector ALU free.
    sig = pl.reciprocal(1.0 + jnp.exp(-y), approx=True)
    out_ref[...] = sig.astype(out_ref.dtype)


def prepare_params(w_enc, b_enc, w_dec, b_dec, *, dot_dtype=jnp.bfloat16):
    """Pad the hidden dim to a full 128-lane MXU width and pre-cast weights ONCE.

    Call outside the hot loop (these are parameters). Padding is numerically
    inert: padded hidden units have zero weight/bias -> ReLU(0)=0 -> contribute
    nothing in the decoder matmul.
    """
    d, hid = w_enc.shape
    assert w_dec.shape == (hid, d)
    hid_p = _round_up(hid, 128)
    if hid_p != hid:
        w_enc = jnp.pad(w_enc, ((0, 0), (0, hid_p - hid)))
        b_enc = jnp.pad(b_enc, ((0, hid_p - hid),))
        w_dec = jnp.pad(w_dec, ((0, hid_p - hid), (0, 0)))
    return (w_enc.astype(dot_dtype),
            b_enc.reshape(1, hid_p).astype(jnp.float32),
            w_dec.astype(dot_dtype),
            b_dec.reshape(1, d).astype(jnp.float32))


def _vmem_cap_bytes():
    # v7x has 64 MiB VMEM per TensorCore -> keep headroom; v5e/v6e have 128 MiB.
    try:
        kind = jax.devices()[0].device_kind.lower()
    except Exception:
        kind = ""
    return (48 << 20) if "7" in kind else (100 << 20)


@functools.partial(jax.jit, static_argnames=("tile_rows", "out_dtype"))
def autoencoder_forward(x_nchw, params, *, tile_rows=512, out_dtype=jnp.float32):
    """Run decoder(encoder(x)) in one fused Pallas call. Returns reconstruction in NCHW."""
    w_enc, b_enc2d, w_dec, b_dec2d = params
    n, c, h, w = x_nchw.shape
    d = c * h * w
    hid_p = w_enc.shape[1]
    assert w_enc.shape == (d, hid_p) and w_dec.shape == (hid_p, d)

    x2d = x_nchw.reshape(n, d).astype(jnp.float32)   # torch-style row-major flatten

    # --- batch tiling: bf16 operands pack 2 rows/sublane -> align rows to 16 ---
    row_align = 16 if w_enc.dtype == jnp.bfloat16 else 8
    n_al = _round_up(max(n, 1), row_align)
    tm = min(_round_up(tile_rows, row_align), n_al)
    n_pad = _round_up(n_al, tm)
    # Prefer >= 4 grid steps when the batch allows it: keeps the DMA/compute
    # pipeline overlapped and load-balances the batch axis across v7x's 2 TCs.
    while n_pad // tm < 4 and tm >= 2 * row_align:
        tm = _round_up(tm // 2, row_align)
        n_pad = _round_up(n_al, tm)
    if n_pad != n:
        x2d = jnp.pad(x2d, ((0, n_pad - n), (0, 0)))

    grid = (n_pad // tm,)
    dot_bytes = jnp.dtype(w_enc.dtype).itemsize
    out_bytes = jnp.dtype(out_dtype).itemsize

    # --- VMEM budget: weights (one logical copy) + double-buffered x/out tiles ---
    bytes_weights = 2 * d * hid_p * dot_bytes + (hid_p + d) * 4
    bytes_tiles = 2 * tm * d * 4 + 2 * tm * d * out_bytes
    vmem_limit = int(min(_vmem_cap_bytes(),
                         max(bytes_weights + bytes_tiles + (4 << 20), 16 << 20)))

    cost = pl.CostEstimate(
        flops=4 * n_pad * d * hid_p,                 # two matmuls, 2*M*N*K each
        transcendentals=n_pad * d,                   # exp in sigmoid
        bytes_accessed=(n_pad * d * 4                # x (f32, read once)
                        + bytes_weights              # weights + biases
                        + n_pad * d * out_bytes),    # output
    )

    out2d = pl.pallas_call(
        _autoencoder_kernel,
        out_shape=jax.ShapeDtypeStruct((n_pad, d), out_dtype),
        grid_spec=pl.GridSpec(
            grid=grid,
            in_specs=[
                pl.BlockSpec((tm, d), lambda i: (i, 0)),        # x tile (pipelined)
                pl.BlockSpec((d, hid_p), lambda i: (0, 0)),     # W_enc (resident)
                pl.BlockSpec((1, hid_p), lambda i: (0, 0)),     # b_enc (resident)
                pl.BlockSpec((hid_p, d), lambda i: (0, 0)),     # W_dec (resident)
                pl.BlockSpec((1, d), lambda i: (0, 0)),         # b_dec (resident)
            ],
            out_specs=pl.BlockSpec((tm, d), lambda i: (i, 0)),  # lane-dense (full D)
        ),
        compiler_params=pltpu.CompilerParams(
            dimension_semantics=("parallel",),                  # megacore on v7x
            vmem_limit_bytes=vmem_limit,
        ),
        cost_estimate=cost,
    )(x2d, w_enc, b_enc2d, w_dec, b_dec2d)

    return out2d[:n].reshape(n, c, h, w)


# TODO(synk): `fit`, `predict`, `print_train_loss_history` are host-side
# training-loop utilities (optimizer steps, loss bookkeeping) with no
# Pallas-kernel equivalent; only the forward hot path is implemented here.


if __name__ == "__main__":
    key = jax.random.PRNGKey(0)
    k_x, k_we, k_be, k_wd, k_bd = jax.random.split(key, 5)

    # Small shapes consistent with the module: NCHW image batch + hidden=32.
    N, C, H, W = 2, 4, 16, 16
    D = C * H * W          # 1024
    HID = 32

    x = jax.random.normal(k_x, (N, C, H, W), dtype=jnp.float32)

    # Deterministic synthetic parameters (torch.nn.Linear-like uniform init).
    lim_e = 1.0 / (D ** 0.5)
    lim_d = 1.0 / (HID ** 0.5)
    w_enc = jax.random.uniform(k_we, (D, HID), jnp.float32, -lim_e, lim_e)
    b_enc = jax.random.uniform(k_be, (HID,), jnp.float32, -lim_e, lim_e)
    w_dec = jax.random.uniform(k_wd, (HID, D), jnp.float32, -lim_d, lim_d)
    b_dec = jax.random.uniform(k_bd, (D,), jnp.float32, -lim_d, lim_d)

    # Pad/cast the parameters once, outside the hot path.
    params = prepare_params(w_enc, b_enc, w_dec, b_dec)

    out = autoencoder_forward(x, params)
    out = jax.block_until_ready(out)
    assert out.shape == (N, C, H, W)

    # Reference with the same bf16 operand / f32 accumulation recipe (tight check;
    # tolerance covers the approximate EUP reciprocal in the kernel's sigmoid).
    x2d = x.reshape(N, D)
    h_ref = jnp.maximum(
        jnp.dot(x2d.astype(jnp.bfloat16), w_enc.astype(jnp.bfloat16),
                preferred_element_type=jnp.float32) + b_enc, 0.0)
    y_ref = jax.nn.sigmoid(
        jnp.dot(h_ref.astype(jnp.bfloat16), w_dec.astype(jnp.bfloat16),
                preferred_element_type=jnp.float32) + b_dec).reshape(N, C, H, W)
    assert jnp.allclose(out, y_ref, atol=5e-3, rtol=5e-3), \
        float(jnp.max(jnp.abs(out - y_ref)))

    # Looser sanity check against a pure-f32 reference (bf16 rounding only).
    h32 = jnp.maximum(x2d @ w_enc + b_enc, 0.0)
    y32 = jax.nn.sigmoid(h32 @ w_dec + b_dec).reshape(N, C, H, W)
    assert jnp.allclose(out, y32, atol=5e-2, rtol=5e-2)

    print("KERNEL_OK")
</pallas_src>

<mosaic_0001>
module attributes {stable_mosaic.version = 11 : i64} {
  func.func @_autoencoder_kernel(%arg0: i32, %arg1: memref<16x1024xf32, #tpu.memory_space<vmem>>, %arg2: memref<1024x128xbf16, #tpu.memory_space<vmem>>, %arg3: memref<1x128xf32, #tpu.memory_space<vmem>>, %arg4: memref<128x1024xbf16, #tpu.memory_space<vmem>>, %arg5: memref<1x1024xf32, #tpu.memory_space<vmem>>, %arg6: memref<16x1024xf32, #tpu.memory_space<vmem>>) attributes {dimension_semantics = [#tpu.dimension_semantics<parallel>], iteration_bounds = array<i64: 1>, scalar_prefetch = 0 : i64, scratch_operands = 0 : i64, tpu.core_type = #tpu.core_type<tc>, window_params = [{transform_indices = @transform_0, window_bounds = array<i64: 16, 1024>}, {pipeline_mode = #tpu.pipeline_mode<synchronous>, transform_indices = @transform_1, window_bounds = array<i64: 1024, 128>}, {pipeline_mode = #tpu.pipeline_mode<synchronous>, transform_indices = @transform_2, window_bounds = array<i64: 1, 128>}, {pipeline_mode = #tpu.pipeline_mode<synchronous>, transform_indices = @transform_3, window_bounds = array<i64: 128, 1024>}, {pipeline_mode = #tpu.pipeline_mode<synchronous>, transform_indices = @transform_4, window_bounds = array<i64: 1, 1024>}, {transform_indices = @transform_5, window_bounds = array<i64: 16, 1024>}]} {
    %c0 = arith.constant 0 : index
    %c0_0 = arith.constant 0 : index
    %0 = vector.load %arg1[%c0, %c0_0] : memref<16x1024xf32, #tpu.memory_space<vmem>>, vector<16x1024xf32>
    %1 = arith.truncf %0 : vector<16x1024xf32> to vector<16x1024xbf16>
    %c0_1 = arith.constant 0 : index
    %c0_2 = arith.constant 0 : index
    %2 = vector.load %arg2[%c0_1, %c0_2] : memref<1024x128xbf16, #tpu.memory_space<vmem>>, vector<1024x128xbf16>
    %cst = arith.constant dense<0.000000e+00> : vector<16x128xf32>
    %3 = tpu.matmul %1, %2, %cst {dimension_numbers = #tpu.dot_dimension_numbers<[1], [0], [0], [1], [0, 0, 1, 1], [], []>} : vector<16x1024xbf16>, vector<1024x128xbf16>, vector<16x128xf32> -> vector<16x128xf32>
    %c0_3 = arith.constant 0 : index
    %c0_4 = arith.constant 0 : index
    %4 = vector.load %arg3[%c0_3, %c0_4] : memref<1x128xf32, #tpu.memory_space<vmem>>, vector<1x128xf32>
    %5 = vector.broadcast %4 : vector<1x128xf32> to vector<16x128xf32>
    %6 = arith.addf %3, %5 : vector<16x128xf32>
    %cst_5 = arith.constant 0.000000e+00 : f32
    %7 = vector.broadcast %cst_5 : f32 to vector<16x128xf32>
    %8 = arith.maximumf %6, %7 : vector<16x128xf32>
    %9 = arith.truncf %8 : vector<16x128xf32> to vector<16x128xbf16>
    %c0_6 = arith.constant 0 : index
    %c0_7 = arith.constant 0 : index
    %10 = vector.load %arg4[%c0_6, %c0_7] : memref<128x1024xbf16, #tpu.memory_space<vmem>>, vector<128x1024xbf16>
    %cst_8 = arith.constant dense<0.000000e+00> : vector<16x1024xf32>
    %11 = tpu.matmul %9, %10, %cst_8 {dimension_numbers = #tpu.dot_dimension_numbers<[1], [0], [0], [1], [0, 0, 1, 1], [], []>} : vector<16x128xbf16>, vector<128x1024xbf16>, vector<16x1024xf32> -> vector<16x1024xf32>
    %c0_9 = arith.constant 0 : index
    %c0_10 = arith.constant 0 : index
    %12 = vector.load %arg5[%c0_9, %c0_10] : memref<1x1024xf32, #tpu.memory_space<vmem>>, vector<1x1024xf32>
    %13 = vector.broadcast %12 : vector<1x1024xf32> to vector<16x1024xf32>
    %14 = arith.addf %11, %13 : vector<16x1024xf32>
    %cst_11 = arith.constant 0.000000e+00 : f32
    %15 = vector.broadcast %cst_11 : f32 to vector<16x1024xf32>
    %16 = arith.subf %15, %14 : vector<16x1024xf32>
    %17 = math.exp %16 : vector<16x1024xf32>
    %cst_12 = arith.constant 1.000000e+00 : f32
    %18 = vector.broadcast %cst_12 : f32 to vector<16x1024xf32>
    %19 = arith.addf %18, %17 : vector<16x1024xf32>
    %20 = tpu.reciprocal %19 {approx = true} : vector<16x1024xf32> -> vector<16x1024xf32>
    %c0_13 = arith.constant 0 : index
    %c0_14 = arith.constant 0 : index
    %21 = vector.load %arg6[%c0_13, %c0_14] : memref<16x1024xf32, #tpu.memory_space<vmem>>, vector<16x1024xf32>
    tpu.vector_store %arg6[%c0_13, %c0_14], %20 {strides = array<i32>} : memref<16x1024xf32, #tpu.memory_space<vmem>>, vector<16x1024xf32>,
    return
  }
  func.func @transform_0(%arg0: i32) -> (i32, i32) {
    %c0_i32 = arith.constant 0 : i32
    %c0_i32_0 = arith.constant 0 : i32
    return %arg0, %c0_i32 : i32, i32
  }
  func.func @transform_1(%arg0: i32) -> (i32, i32) {
    %c0_i32 = arith.constant 0 : i32
    %c0_i32_0 = arith.constant 0 : i32
    %c0_i32_1 = arith.constant 0 : i32
    return %c0_i32, %c0_i32_0 : i32, i32
  }
  func.func @transform_2(%arg0: i32) -> (i32, i32) {
    %c0_i32 = arith.constant 0 : i32
    %c0_i32_0 = arith.constant 0 : i32
    %c0_i32_1 = arith.constant 0 : i32
    return %c0_i32, %c0_i32_0 : i32, i32
  }
  func.func @transform_3(%arg0: i32) -> (i32, i32) {
    %c0_i32 = arith.constant 0 : i32
    %c0_i32_0 = arith.constant 0 : i32
    %c0_i32_1 = arith.constant 0 : i32
    return %c0_i32, %c0_i32_0 : i32, i32
  }
  func.func @transform_4(%arg0: i32) -> (i32, i32) {
    %c0_i32 = arith.constant 0 : i32
    %c0_i32_0 = arith.constant 0 : i32
    %c0_i32_1 = arith.constant 0 : i32
    return %c0_i32, %c0_i32_0 : i32, i32
  }
  func.func @transform_5(%arg0: i32) -> (i32, i32) {
    %c0_i32 = arith.constant 0 : i32
    %c0_i32_0 = arith.constant 0 : i32
    return %arg0, %c0_i32 : i32, i32
  }
}

</mosaic_0001>

<llo_original>
// kernel: autoencoder_forward.1
$region0: #{autoencoder_forward.1}
  #allocation0 [shape = 'u32[]', space=smem, size = 0x4, offset = 0x4, fixed_abs, tag = 'smem constant byte address 0x4 - core index']
  #allocation1 [shape = 'u32[144,128]{1,0:T(1,128)}', space=vmem, size = 0x12000, scoped, tag = 'internal scratch']
  %s0 = inlined_call_operand.vmem [shape: f32[16,1024], index: 0, kind: input, shape index: {}]
  %s1 = inlined_call_operand.hbm [shape: bf16[1024,128], index: 1, kind: input, shape index: {}]
  %s2 = inlined_call_operand.vmem [shape: f32[1,128], index: 2, kind: input, shape index: {}]
  %s3 = inlined_call_operand.hbm [shape: bf16[128,1024], index: 3, kind: input, shape index: {}]
  %s4 = inlined_call_operand.vmem [shape: f32[1,1024], index: 4, kind: input, shape index: {}]
  %s5 = inlined_call_operand.vmem [shape: f32[16,1024], index: 5, kind: output, shape index: {}]
  %s6 = sld [smem:[#allocation0]]
  $region38: #{autoencoder_forward.1} parent=0
    _
  %s8 = ssub.s32 1, %s6
  %s9 = scalar_select 0, %s8, %s6
  $region1: #{autoencoder_forward.1} parent=0
    #allocation2 [shape = 'u8[262144]{0}', space=vmem, size = 0x40000, scoped, tag = 'input window, operand 1, single buffered']
    #allocation3 [shape = 's32[1]{0}', space=sflag, size = 0x4, scoped, tag = 'scoped memory for autoencoder_forward.1']
    #allocation4 [shape = 'u8[262144]{0}', space=vmem, size = 0x40000, scoped, tag = 'input window, operand 3, single buffered']
    #allocation5 [shape = 's32[1]{0}', space=sflag, size = 0x4, scoped, tag = 'scoped memory for autoencoder_forward.1']
    %10 = vsyncpa [#allocation3], 0
    %11 = vsyncpa [#allocation5], 0
    // Predicated region
    $region2: #{autoencoder_forward.1} parent=1 // pred_check
      _
    $region3: #{autoencoder_forward.1} parent=1 // pred_check_branch
      %13 = sbr.rel (0) target = $region5
    $region4: #{autoencoder_forward.1} parent=1 // pred_region
      _
    $region5: #{autoencoder_forward.1} parent=1 // pred_fallthru
      _
    // Predicated region
    $region6: #{autoencoder_forward.1} parent=1 // pred_check
      _
    $region7: #{autoencoder_forward.1} parent=1 // pred_check_branch
      %15 = sbr.rel (0) target = $region9
    $region8: #{autoencoder_forward.1} parent=1 // pred_region
      %s17 = ssub.s32 8192, 8192
      %18 = vsyncadd [#allocation3], %s17
      %s19 = sshll.u32 [#allocation2], 4
      %s20 = int_to_ptr.vmem [resolvable:$true] %s19
      %25 = dma.hbm_to_vmem [thread:$0]  %s1, 8192, %s20, [#allocation3], 64, 64, 4
    $region9: #{autoencoder_forward.1} parent=1 // pred_fallthru
      _
    // Predicated region
    $region10: #{autoencoder_forward.1} parent=1 // pred_check
      _
    $region11: #{autoencoder_forward.1} parent=1 // pred_check_branch
      %27 = sbr.rel (0) target = $region13
    $region12: #{autoencoder_forward.1} parent=1 // pred_region
      _
    $region13: #{autoencoder_forward.1} parent=1 // pred_fallthru
      _
    // Predicated region
    $region14: #{autoencoder_forward.1} parent=1 // pred_check
      _
    $region15: #{autoencoder_forward.1} parent=1 // pred_check_branch
      %29 = sbr.rel (0) target = $region17
    $region16: #{autoencoder_forward.1} parent=1 // pred_region
      %s31 = ssub.s32 8192, 8192
      %32 = vsyncadd [#allocation5], %s31
      %s33 = sshll.u32 [#allocation4], 4
      %s34 = int_to_ptr.vmem [resolvable:$true] %s33
      %39 = dma.hbm_to_vmem [thread:$0]  %s3, 8192, %s34, [#allocation5], 512, 512, 32
    $region17: #{autoencoder_forward.1} parent=1 // pred_fallthru
      _
    // Predicated region
    $region18: #{autoencoder_forward.1} parent=1 // pred_check
      _
    $region19: #{autoencoder_forward.1} parent=1 // pred_check_branch
      %41 = sbr.rel (0) target = $region21
    $region20: #{autoencoder_forward.1} parent=1 // pred_region
      _
    $region21: #{autoencoder_forward.1} parent=1 // pred_fallthru
      _
    // Predicated region
    $region22: #{autoencoder_forward.1} parent=1 // pred_check
      _
    $region23: #{autoencoder_forward.1} parent=1 // pred_check_branch
      %43 = sbr.rel (0) target = $region25
    $region24: #{autoencoder_forward.1} parent=1 // pred_region
      %44 = dma.done [#allocation3], 8192
    $region25: #{autoencoder_forward.1} parent=1 // pred_fallthru
      _
    // Predicated region
    $region26: #{autoencoder_forward.1} parent=1 // pred_check
      _
    $region27: #{autoencoder_forward.1} parent=1 // pred_check_branch
      %46 = sbr.rel (0) target = $region29
    $region28: #{autoencoder_forward.1} parent=1 // pred_region
      %47 = dma.done [#allocation5], 8192
    $region29: #{autoencoder_forward.1} parent=1 // pred_fallthru
      _
    %v49 = vld [vmem:[%s0] sm:$0xff]
    %v50 = vld [vmem:[%s0 + $0x8] sm:$0xff]
    %v51 = vld [vmem:[%s0 + $0x10] sm:$0xff]
    %v52 = vld [vmem:[%s0 + $0x18] sm:$0xff]
    %v53 = vld [vmem:[%s0 + $0x20] sm:$0xff]
    %v54 = vld [vmem:[%s0 + $0x28] sm:$0xff]
    %v55 = vld [vmem:[%s0 + $0x30] sm:$0xff]
    %v56 = vld [vmem:[%s0 + $0x38] sm:$0xff]
    %v57 = vld [vmem:[%s0 + $0x40] sm:$0xff]
    %v58 = vld [vmem:[%s0 + $0x48] sm:$0xff]
    %v59 = vld [vmem:[%s0 + $0x50] sm:$0xff]
    %v60 = vld [vmem:[%s0 + $0x58] sm:$0xff]
    %v61 = vld [vmem:[%s0 + $0x60] sm:$0xff]
    %v62 = vld [vmem:[%s0 + $0x68] sm:$0xff]
    %v63 = vld [vmem:[%s0 + $0x70] sm:$0xff]
    %v64 = vld [vmem:[%s0 + $0x78] sm:$0xff]
    %v65 = vpack.c.bf16 %v57, %v49
    %v66 = vpack.c.bf16 %v58, %v50
    %v67 = vpack.c.bf16 %v59, %v51
    %v68 = vpack.c.bf16 %v60, %v52
    %v69 = vpack.c.bf16 %v61, %v53
    %v70 = vpack.c.bf16 %v62, %v54
    %v71 = vpack.c.bf16 %v63, %v55
    %v72 = vpack.c.bf16 %v64, %v56
    %v73 = vld [vmem:[#allocation2] sm:$0xf]
    %v74 = vld [vmem:[#allocation2 + $0x4] sm:$0xf]
    %v75 = vld [vmem:[#allocation2 + $0x8] sm:$0xf]
    %v76 = vld [vmem:[#allocation2 + $0xc] sm:$0xf]
    %v77 = vld [vmem:[#allocation2 + $0x10] sm:$0xf]
    %v78 = vld [vmem:[#allocation2 + $0x14] sm:$0xf]
    %v79 = vld [vmem:[#allocation2 + $0x18] sm:$0xf]
    %v80 = vld [vmem:[#allocation2 + $0x1c] sm:$0xf]
    %v81 = vld [vmem:[#allocation2 + $0x20] sm:$0xf]
    %v82 = vld [vmem:[#allocation2 + $0x24] sm:$0xf]
    %v83 = vld [vmem:[#allocation2 + $0x28] sm:$0xf]
    %v84 = vld [vmem:[#allocation2 + $0x2c] sm:$0xf]
    %v85 = vld [vmem:[#allocation2 + $0x30] sm:$0xf]
    %v86 = vld [vmem:[#allocation2 + $0x34] sm:$0xf]
    %v87 = vld [vmem:[#allocation2 + $0x38] sm:$0xf]
    %v88 = vld [vmem:[#allocation2 + $0x3c] sm:$0xf]
    %v89 = vld [vmem:[#allocation2 + $0x40] sm:$0xf]
    %v90 = vld [vmem:[#allocation2 + $0x44] sm:$0xf]
    %v91 = vld [vmem:[#allocation2 + $0x48] sm:$0xf]
    %v92 = vld [vmem:[#allocation2 + $0x4c] sm:$0xf]
    %v93 = vld [vmem:[#allocation2 + $0x50] sm:$0xf]
    %v94 = vld [vmem:[#allocation2 + $0x54] sm:$0xf]
    %v95 = vld [vmem:[#allocation2 + $0x58] sm:$0xf]
    %v96 = vld [vmem:[#allocation2 + $0x5c] sm:$0xf]
    %v97 = vld [vmem:[#allocation2 + $0x60] sm:$0xf]
    %v98 = vld [vmem:[#allocation2 + $0x64] sm:$0xf]
    %v99 = vld [vmem:[#allocation2 + $0x68] sm:$0xf]
    %v100 = vld [vmem:[#allocation2 + $0x6c] sm:$0xf]
    %v101 = vld [vmem:[#allocation2 + $0x70] sm:$0xf]
    %v102 = vld [vmem:[#allocation2 + $0x74] sm:$0xf]
    %v103 = vld [vmem:[#allocation2 + $0x78] sm:$0xf]
    %v104 = vld [vmem:[#allocation2 + $0x7c] sm:$0xf]
    %v105 = vld [vmem:[#allocation2 + $0x80] sm:$0xf]
    %v106 = vld [vmem:[#allocation2 + $0x84] sm:$0xf]
    %v107 = vld [vmem:[#allocation2 + $0x88] sm:$0xf]
    %v108 = vld [vmem:[#allocation2 + $0x8c] sm:$0xf]
    %v109 = vld [vmem:[#allocation2 + $0x90] sm:$0xf]
    %v110 = vld [vmem:[#allocation2 + $0x94] sm:$0xf]
    %v111 = vld [vmem:[#allocation2 + $0x98] sm:$0xf]
    %v112 = vld [vmem:[#allocation2 + $0x9c] sm:$0xf]
    %v113 = vld [vmem:[#allocation2 + $0xa0] sm:$0xf]
    %v114 = vld [vmem:[#allocation2 + $0xa4] sm:$0xf]
    %v115 = vld [vmem:[#allocation2 + $0xa8] sm:$0xf]
    %v116 = vld [vmem:[#allocation2 + $0xac] sm:$0xf]
    %v117 = vld [vmem:[#allocation2 + $0xb0] sm:$0xf]
    %v118 = vld [vmem:[#allocation2 + $0xb4] sm:$0xf]
    %v119 = vld [vmem:[#allocation2 + $0xb8] sm:$0xf]
    %v120 = vld [vmem:[#allocation2 + $0xbc] sm:$0xf]
    %v121 = vld [vmem:[#allocation2 + $0xc0] sm:$0xf]
    %v122 = vld [vmem:[#allocation2 + $0xc4] sm:$0xf]
    %v123 = vld [vmem:[#allocation2 + $0xc8] sm:$0xf]
    %v124 = vld [vmem:[#allocation2 + $0xcc] sm:$0xf]
    %v125 = vld [vmem:[#allocation2 + $0xd0] sm:$0xf]
    %v126 = vld [vmem:[#allocation2 + $0xd4] sm:$0xf]
    %v127 = vld [vmem:[#allocation2 + $0xd8] sm:$0xf]
    %v128 = vld [vmem:[#allocation2 + $0xdc] sm:$0xf]
    %v129 = vld [vmem:[#allocation2 + $0xe0] sm:$0xf]
    %v130 = vld [vmem:[#allocation2 + $0xe4] sm:$0xf]
    %v131 = vld [vmem:[#allocation2 + $0xe8] sm:$0xf]
    %v132 = vld [vmem:[#allocation2 + $0xec] sm:$0xf]
    %v133 = vld [vmem:[#allocation2 + $0xf0] sm:$0xf]
    %v134 = vld [vmem:[#allocation2 + $0xf4] sm:$0xf]
    %v135 = vld [vmem:[#allocation2 + $0xf8] sm:$0xf]
    %v136 = vld [vmem:[#allocation2 + $0xfc] sm:$0xf]
    %v137 = vld [vmem:[#allocation2 + $0x100] sm:$0xf]
    %v138 = vld [vmem:[#allocation2 + $0x104] sm:$0xf]
    %v139 = vld [vmem:[#allocation2 + $0x108] sm:$0xf]
    %v140 = vld [vmem:[#allocation2 + $0x10c] sm:$0xf]
    %v141 = vld [vmem:[#allocation2 + $0x110] sm:$0xf]
    %v142 = vld [vmem:[#allocation2 + $0x114] sm:$0xf]
    %v143 = vld [vmem:[#allocation2 + $0x118] sm:$0xf]
    %v144 = vld [vmem:[#allocation2 + $0x11c] sm:$0xf]
    %v145 = vld [vmem:[#allocation2 + $0x120] sm:$0xf]
    %v146 = vld [vmem:[#allocation2 + $0x124] sm:$0xf]
    %v147 = vld [vmem:[#allocation2 + $0x128] sm:$0xf]
    %v148 = vld [vmem:[#allocation2 + $0x12c] sm:$0xf]
    %v149 = vld [vmem:[#allocation2 + $0x130] sm:$0xf]
    %v150 = vld [vmem:[#allocation2 + $0x134] sm:$0xf]
    %v151 = vld [vmem:[#allocation2 + $0x138] sm:$0xf]
    %v152 = vld [vmem:[#allocation2 + $0x13c] sm:$0xf]
    %v153 = vld [vmem:[#allocation2 + $0x140] sm:$0xf]
    %v154 = vld [vmem:[#allocation2 + $0x144] sm:$0xf]
    %v155 = vld [vmem:[#allocation2 + $0x148] sm:$0xf]
    %v156 = vld [vmem:[#allocation2 + $0x14c] sm:$0xf]
    %v157 = vld [vmem:[#allocation2 + $0x150] sm:$0xf]
    %v158 = vld [vmem:[#allocation2 + $0x154] sm:$0xf]
    %v159 = vld [vmem:[#allocation2 + $0x158] sm:$0xf]
    %v160 = vld [vmem:[#allocation2 + $0x15c] sm:$0xf]
    %v161 = vld [vmem:[#allocation2 + $0x160] sm:$0xf]
    %v162 = vld [vmem:[#allocation2 + $0x164] sm:$0xf]
    %v163 = vld [vmem:[#allocation2 + $0x168] sm:$0xf]
    %v164 = vld [vmem:[#allocation2 + $0x16c] sm:$0xf]
    %v165 = vld [vmem:[#allocation2 + $0x170] sm:$0xf]
    %v166 = vld [vmem:[#allocation2 + $0x174] sm:$0xf]
    %v167 = vld [vmem:[#allocation2 + $0x178] sm:$0xf]
    %v168 = vld [vmem:[#allocation2 + $0x17c] sm:$0xf]
    %v169 = vld [vmem:[#allocation2 + $0x180] sm:$0xf]
    %v170 = vld [vmem:[#allocation2 + $0x184] sm:$0xf]
    %v171 = vld [vmem:[#allocation2 + $0x188] sm:$0xf]
    %v172 = vld [vmem:[#allocation2 + $0x18c] sm:$0xf]
    %v173 = vld [vmem:[#allocation2 + $0x190] sm:$0xf]
    %v174 = vld [vmem:[#allocation2 + $0x194] sm:$0xf]
    %v175 = vld [vmem:[#allocation2 + $0x198] sm:$0xf]
    %v176 = vld [vmem:[#allocation2 + $0x19c] sm:$0xf]
    %v177 = vld [vmem:[#allocation2 + $0x1a0] sm:$0xf]
    %v178 = vld [vmem:[#allocation2 + $0x1a4] sm:$0xf]
    %v179 = vld [vmem:[#allocation2 + $0x1a8] sm:$0xf]
    %v180 = vld [vmem:[#allocation2 + $0x1ac] sm:$0xf]
    %v181 = vld [vmem:[#allocation2 + $0x1b0] sm:$0xf]
    %v182 = vld [vmem:[#allocation2 + $0x1b4] sm:$0xf]
    %v183 = vld [vmem:[#allocation2 + $0x1b8] sm:$0xf]
    %v184 = vld [vmem:[#allocation2 + $0x1bc] sm:$0xf]
    %v185 = vld [vmem:[#allocation2 + $0x1c0] sm:$0xf]
    %v186 = vld [vmem:[#allocation2 + $0x1c4] sm:$0xf]
    %v187 = vld [vmem:[#allocation2 + $0x1c8] sm:$0xf]
    %v188 = vld [vmem:[#allocation2 + $0x1cc] sm:$0xf]
    %v189 = vld [vmem:[#allocation2 + $0x1d0] sm:$0xf]
    %v190 = vld [vmem:[#allocation2 + $0x1d4] sm:$0xf]
    %v191 = vld [vmem:[#allocation2 + $0x1d8] sm:$0xf]
    %v192 = vld [vmem:[#allocation2 + $0x1dc] sm:$0xf]
    %v193 = vld [vmem:[#allocation2 + $0x1e0] sm:$0xf]
    %v194 = vld [vmem:[#allocation2 + $0x1e4] sm:$0xf]
    %v195 = vld [vmem:[#allocation2 + $0x1e8] sm:$0xf]
    %v196 = vld [vmem:[#allocation2 + $0x1ec] sm:$0xf]
    %v197 = vld [vmem:[#allocation2 + $0x1f0] sm:$0xf]
    %v198 = vld [vmem:[#allocation2 + $0x1f4] sm:$0xf]
    %v199 = vld [vmem:[#allocation2 + $0x1f8] sm:$0xf]
    %v200 = vld [vmem:[#allocation2 + $0x1fc] sm:$0xf]
    %v201 = vld [vmem:[%s2] sm:$0x1]
    %v203 = vlaneseq
    %v204 = vshrl.u32 %v203, 7
    %v205 = vsub.s32 0, %v204
    %v206 = vrot.slane %v201, %v205
    %v336 = vunpack.c.l.b16 %v73
    %v337 = vunpack.c.l.b16 %v74
    %v338 = vunpack.c.l.b16 %v75
    %v339 = vunpack.c.l.b16 %v76
    %v340 = vunpack.c.l.b16 %v77
    %v341 = vunpack.c.l.b16 %v78
    %v342 = vunpack.c.l.b16 %v79
    %v343 = vunpack.c.l.b16 %v80
    %v344 = vunpack.c.l.b16 %v81
    %v345 = vunpack.c.l.b16 %v82
    %v346 = vunpack.c.l.b16 %v83
    %v347 = vunpack.c.l.b16 %v84
    %v348 = vunpack.c.l.b16 %v85
    %v349 = vunpack.c.l.b16 %v86
    %v350 = vunpack.c.l.b16 %v87
    %v351 = vunpack.c.l.b16 %v88
    %v352 = vunpack.c.l.b16 %v89
    %v353 = vunpack.c.l.b16 %v90
    %v354 = vunpack.c.l.b16 %v91
    %v355 = vunpack.c.l.b16 %v92
    %v356 = vunpack.c.l.b16 %v93
    %v357 = vunpack.c.l.b16 %v94
    %v358 = vunpack.c.l.b16 %v95
    %v359 = vunpack.c.l.b16 %v96
    %v360 = vunpack.c.l.b16 %v97
    %v361 = vunpack.c.l.b16 %v98
    %v362 = vunpack.c.l.b16 %v99
    %v363 = vunpack.c.l.b16 %v100
    %v364 = vunpack.c.l.b16 %v101
    %v365 = vunpack.c.l.b16 %v102
    %v366 = vunpack.c.l.b16 %v103
    %v367 = vunpack.c.l.b16 %v104
    %v368 = vunpack.c.l.b16 %v105
    %v369 = vunpack.c.l.b16 %v106
    %v370 = vunpack.c.l.b16 %v107
    %v371 = vunpack.c.l.b16 %v108
    %v372 = vunpack.c.l.b16 %v109
    %v373 = vunpack.c.l.b16 %v110
    %v374 = vunpack.c.l.b16 %v111
    %v375 = vunpack.c.l.b16 %v112
    %v376 = vunpack.c.l.b16 %v113
    %v377 = vunpack.c.l.b16 %v114
    %v378 = vunpack.c.l.b16 %v115
    %v379 = vunpack.c.l.b16 %v116
    %v380 = vunpack.c.l.b16 %v117
    %v381 = vunpack.c.l.b16 %v118
    %v382 = vunpack.c.l.b16 %v119
    %v383 = vunpack.c.l.b16 %v120
    %v384 = vunpack.c.l.b16 %v121
    %v385 = vunpack.c.l.b16 %v122
    %v386 = vunpack.c.l.b16 %v123
    %v387 = vunpack.c.l.b16 %v124
    %v388 = vunpack.c.l.b16 %v125
    %v389 = vunpack.c.l.b16 %v126
    %v390 = vunpack.c.l.b16 %v127
    %v391 = vunpack.c.l.b16 %v128
    %v392 = vunpack.c.l.b16 %v129
    %v393 = vunpack.c.l.b16 %v130
    %v394 = vunpack.c.l.b16 %v131
    %v395 = vunpack.c.l.b16 %v132
    %v396 = vunpack.c.l.b16 %v133
    %v397 = vunpack.c.l.b16 %v134
    %v398 = vunpack.c.l.b16 %v135
    %v399 = vunpack.c.l.b16 %v136
    %v400 = vunpack.c.l.b16 %v137
    %v401 = vunpack.c.l.b16 %v138
    %v402 = vunpack.c.l.b16 %v139
    %v403 = vunpack.c.l.b16 %v140
    %v404 = vunpack.c.l.b16 %v141
    %v405 = vunpack.c.l.b16 %v142
    %v406 = vunpack.c.l.b16 %v143
    %v407 = vunpack.c.l.b16 %v144
    %v408 = vunpack.c.l.b16 %v145
    %v409 = vunpack.c.l.b16 %v146
    %v410 = vunpack.c.l.b16 %v147
    %v411 = vunpack.c.l.b16 %v148
    %v412 = vunpack.c.l.b16 %v149
    %v413 = vunpack.c.l.b16 %v150
    %v414 = vunpack.c.l.b16 %v151
    %v415 = vunpack.c.l.b16 %v152
    %v416 = vunpack.c.l.b16 %v153
    %v417 = vunpack.c.l.b16 %v154
    %v418 = vunpack.c.l.b16 %v155
    %v419 = vunpack.c.l.b16 %v156
    %v420 = vunpack.c.l.b16 %v157
    %v421 = vunpack.c.l.b16 %v158
    %v422 = vunpack.c.l.b16 %v159
    %v423 = vunpack.c.l.b16 %v160
    %v424 = vunpack.c.l.b16 %v161
    %v425 = vunpack.c.l.b16 %v162
    %v426 = vunpack.c.l.b16 %v163
    %v427 = vunpack.c.l.b16 %v164
    %v428 = vunpack.c.l.b16 %v165
    %v429 = vunpack.c.l.b16 %v166
    %v430 = vunpack.c.l.b16 %v167
    %v431 = vunpack.c.l.b16 %v168
    %v432 = vunpack.c.l.b16 %v169
    %v433 = vunpack.c.l.b16 %v170
    %v434 = vunpack.c.l.b16 %v171
    %v435 = vunpack.c.l.b16 %v172
    %v436 = vunpack.c.l.b16 %v173
    %v437 = vunpack.c.l.b16 %v174
    %v438 = vunpack.c.l.b16 %v175
    %v439 = vunpack.c.l.b16 %v176
    %v440 = vunpack.c.l.b16 %v177
    %v441 = vunpack.c.l.b16 %v178
    %v442 = vunpack.c.l.b16 %v179
    %v443 = vunpack.c.l.b16 %v180
    %v444 = vunpack.c.l.b16 %v181
    %v445 = vunpack.c.l.b16 %v182
    %v446 = vunpack.c.l.b16 %v183
    %v447 = vunpack.c.l.b16 %v184
    %v448 = vunpack.c.l.b16 %v185
    %v449 = vunpack.c.l.b16 %v186
    %v450 = vunpack.c.l.b16 %v187
    %v451 = vunpack.c.l.b16 %v188
    %v452 = vunpack.c.l.b16 %v189
    %v453 = vunpack.c.l.b16 %v190
    %v454 = vunpack.c.l.b16 %v191
    %v455 = vunpack.c.l.b16 %v192
    %v456 = vunpack.c.l.b16 %v193
    %v457 = vunpack.c.l.b16 %v194
    %v458 = vunpack.c.l.b16 %v195
    %v459 = vunpack.c.l.b16 %v196
    %v460 = vunpack.c.l.b16 %v197
    %v461 = vunpack.c.l.b16 %v198
    %v462 = vunpack.c.l.b16 %v199
    %v463 = vunpack.c.l.b16 %v200
    %v464 = vpack.c.b16 %v337, %v336
    %v465 = vpack.c.b16 %v339, %v338
    %v466 = vpack.c.b16 %v341, %v340
    %v467 = vpack.c.b16 %v343, %v342
    %v468 = vpack.c.b16 %v345, %v344
    %v469 = vpack.c.b16 %v347, %v346
    %v470 = vpack.c.b16 %v349, %v348
    %v471 = vpack.c.b16 %v351, %v350
    %v472 = vpack.c.b16 %v353, %v352
    %v473 = vpack.c.b16 %v355, %v354
    %v474 = vpack.c.b16 %v357, %v356
    %v475 = vpack.c.b16 %v359, %v358
    %v476 = vpack.c.b16 %v361, %v360
    %v477 = vpack.c.b16 %v363, %v362
    %v478 = vpack.c.b16 %v365, %v364
    %v479 = vpack.c.b16 %v367, %v366
    %v480 = vpack.c.b16 %v369, %v368
    %v481 = vpack.c.b16 %v371, %v370
    %v482 = vpack.c.b16 %v373, %v372
    %v483 = vpack.c.b16 %v375, %v374
    %v484 = vpack.c.b16 %v377, %v376
    %v485 = vpack.c.b16 %v379, %v378
    %v486 = vpack.c.b16 %v381, %v380
    %v487 = vpack.c.b16 %v383, %v382
    %v488 = vpack.c.b16 %v385, %v384
    %v489 = vpack.c.b16 %v387, %v386
    %v490 = vpack.c.b16 %v389, %v388
    %v491 = vpack.c.b16 %v391, %v390
    %v492 = vpack.c.b16 %v393, %v392
    %v493 = vpack.c.b16 %v395, %v394
    %v494 = vpack.c.b16 %v397, %v396
    %v495 = vpack.c.b16 %v399, %v398
    %v496 = vpack.c.b16 %v401, %v400
    %v497 = vpack.c.b16 %v403, %v402
    %v498 = vpack.c.b16 %v405, %v404
    %v499 = vpack.c.b16 %v407, %v406
    %v500 = vpack.c.b16 %v409, %v408
    %v501 = vpack.c.b16 %v411, %v410
    %v502 = vpack.c.b16 %v413, %v412
    %v503 = vpack.c.b16 %v415, %v414
    %v504 = vpack.c.b16 %v417, %v416
    %v505 = vpack.c.b16 %v419, %v418
    %v506 = vpack.c.b16 %v421, %v420
    %v507 = vpack.c.b16 %v423, %v422
    %v508 = vpack.c.b16 %v425, %v424
    %v509 = vpack.c.b16 %v427, %v426
    %v510 = vpack.c.b16 %v429, %v428
    %v511 = vpack.c.b16 %v431, %v430
    %v512 = vpack.c.b16 %v433, %v432
    %v513 = vpack.c.b16 %v435, %v434
    %v514 = vpack.c.b16 %v437, %v436
    %v515 = vpack.c.b16 %v439, %v438
    %v516 = vpack.c.b16 %v441, %v440
    %v517 = vpack.c.b16 %v443, %v442
    %v518 = vpack.c.b16 %v445, %v444
    %v519 = vpack.c.b16 %v447, %v446
    %v520 = vpack.c.b16 %v449, %v448
    %v521 = vpack.c.b16 %v451, %v450
    %v522 = vpack.c.b16 %v453, %v452
    %v523 = vpack.c.b16 %v455, %v454
    %v524 = vpack.c.b16 %v457, %v456
    %v525 = vpack.c.b16 %v459, %v458
    %v526 = vpack.c.b16 %v461, %v460
    %v527 = vpack.c.b16 %v463, %v462
    %592 = vmatprep.subr.bf16.mxu0 0
    %593 = vmatpush1.bf16.msra.mxu0 %v464
    %594 = vmatprep.subr.bf16.mxu0 0
    %595 = vmatpush1.bf16.msra.mxu0 %v465
    %596 = vmatprep.subr.bf16.mxu0 0
    %597 = vmatpush1.bf16.msra.mxu0 %v466
    %598 = vmatprep.subr.bf16.mxu0 0
    %599 = vmatpush1.bf16.msra.mxu0 %v467
    %600 = vmatprep.subr.bf16.mxu0 0
    %601 = vmatpush1.bf16.msra.mxu0 %v468
    %602 = vmatprep.subr.bf16.mxu0 0
    %603 = vmatpush1.bf16.msra.mxu0 %v469
    %604 = vmatprep.subr.bf16.mxu0 0
    %605 = vmatpush1.bf16.msra.mxu0 %v470
    %606 = vmatprep.subr.bf16.mxu0 0
    %607 = vmatpush1.bf16.msra.mxu0 %v471
    %608 = vmatprep.subr.bf16.mxu0 0
    %609 = vmatpush1.bf16.msra.mxu0 %v472
    %610 = vmatprep.subr.bf16.mxu0 0
    %611 = vmatpush1.bf16.msra.mxu0 %v473
    %612 = vmatprep.subr.bf16.mxu0 0
    %613 = vmatpush1.bf16.msra.mxu0 %v474
    %614 = vmatprep.subr.bf16.mxu0 0
    %615 = vmatpush1.bf16.msra.mxu0 %v475
    %616 = vmatprep.subr.bf16.mxu0 0
    %617 = vmatpush1.bf16.msra.mxu0 %v476
    %618 = vmatprep.subr.bf16.mxu0 0
    %619 = vmatpush1.bf16.msra.mxu0 %v477
    %620 = vmatprep.subr.bf16.mxu0 0
    %621 = vmatpush1.bf16.msra.mxu0 %v478
    %622 = vmatprep.subr.bf16.mxu0 0
    %623 = vmatpush1.bf16.msra.mxu0 %v479
    %624 = vmatprep.mubr.bf16.mxu0 %v66
    %625 = vmatmul.mubr.bf16.gmra.mrb[0].mxu0 %v65
    %v626 = vpop.f32.mrb[0].mxu0
    %v627 = vadd.f32 %v206, %v626
    %v628 = vpop.f32.mrb[0].mxu0
    %v629 = vpop.f32.mrb[0].mxu0
    %v630 = vadd.f32 %v206, %v629
    %v631 = vpop.f32.mrb[0].mxu0
    %632 = vdwg.mxu0
    %633 = vmatprep.subr.bf16.mxu0 0
    %634 = vmatpush1.bf16.msra.mxu0 %v480
    %635 = vmatprep.subr.bf16.mxu0 0
    %636 = vmatpush1.bf16.msra.mxu0 %v481
    %637 = vmatprep.subr.bf16.mxu0 0
    %638 = vmatpush1.bf16.msra.mxu0 %v482
    %639 = vmatprep.subr.bf16.mxu0 0
    %640 = vmatpush1.bf16.msra.mxu0 %v483
    %641 = vmatprep.subr.bf16.mxu0 0
    %642 = vmatpush1.bf16.msra.mxu0 %v484
    %643 = vmatprep.subr.bf16.mxu0 0
    %644 = vmatpush1.bf16.msra.mxu0 %v485
    %645 = vmatprep.subr.bf16.mxu0 0
    %646 = vmatpush1.bf16.msra.mxu0 %v486
    %647 = vmatprep.subr.bf16.mxu0 0
    %648 = vmatpush1.bf16.msra.mxu0 %v487
    %649 = vmatprep.subr.bf16.mxu0 0
    %650 = vmatpush1.bf16.msra.mxu0 %v488
    %651 = vmatprep.subr.bf16.mxu0 0
    %652 = vmatpush1.bf16.msra.mxu0 %v489
    %653 = vmatprep.subr.bf16.mxu0 0
    %654 = vmatpush1.bf16.msra.mxu0 %v490
    %655 = vmatprep.subr.bf16.mxu0 0
    %656 = vmatpush1.bf16.msra.mxu0 %v491
    %657 = vmatprep.subr.bf16.mxu0 0
    %658 = vmatpush1.bf16.msra.mxu0 %v492
    %659 = vmatprep.subr.bf16.mxu0 0
    %660 = vmatpush1.bf16.msra.mxu0 %v493
    %661 = vmatprep.subr.bf16.mxu0 0
    %662 = vmatpush1.bf16.msra.mxu0 %v494
    %663 = vmatprep.subr.bf16.mxu0 0
    %664 = vmatpush1.bf16.msra.mxu0 %v495
    %665 = vmatprep.mubr.bf16.mxu0 %v68
    %666 = vmatmul.mubr.bf16.gmra.mrb[0].mxu0 %v67
    %v667 = vpop.f32.mrb[0].mxu0
    %v668 = vadd.f32 %v627, %v667
    %v669 = vpop.f32.mrb[0].mxu0
    %v670 = vpop.f32.mrb[0].mxu0
    %v671 = vadd.f32 %v630, %v670
    %v672 = vpop.f32.mrb[0].mxu0
    %673 = vdwg.mxu0
    %674 = vmatprep.subr.bf16.mxu0 0
    %675 = vmatpush1.bf16.msra.mxu0 %v496
    %676 = vmatprep.subr.bf16.mxu0 0
    %677 = vmatpush1.bf16.msra.mxu0 %v497
    %678 = vmatprep.subr.bf16.mxu0 0
    %679 = vmatpush1.bf16.msra.mxu0 %v498
    %680 = vmatprep.subr.bf16.mxu0 0
    %681 = vmatpush1.bf16.msra.mxu0 %v499
    %682 = vmatprep.subr.bf16.mxu0 0
    %683 = vmatpush1.bf16.msra.mxu0 %v500
    %684 = vmatprep.subr.bf16.mxu0 0
    %685 = vmatpush1.bf16.msra.mxu0 %v501
    %686 = vmatprep.subr.bf16.mxu0 0
    %687 = vmatpush1.bf16.msra.mxu0 %v502
    %688 = vmatprep.subr.bf16.mxu0 0
    %689 = vmatpush1.bf16.msra.mxu0 %v503
    %690 = vmatprep.subr.bf16.mxu0 0
    %691 = vmatpush1.bf16.msra.mxu0 %v504
    %692 = vmatprep.subr.bf16.mxu0 0
    %693 = vmatpush1.bf16.msra.mxu0 %v505
    %694 = vmatprep.subr.bf16.mxu0 0
    %695 = vmatpush1.bf16.msra.mxu0 %v506
    %696 = vmatprep.subr.bf16.mxu0 0
    %697 = vmatpush1.bf16.msra.mxu0 %v507
    %698 = vmatprep.subr.bf16.mxu0 0
    %699 = vmatpush1.bf16.msra.mxu0 %v508
    %700 = vmatprep.subr.bf16.mxu0 0
    %701 = vmatpush1.bf16.msra.mxu0 %v509
    %702 = vmatprep.subr.bf16.mxu0 0
    %703 = vmatpush1.bf16.msra.mxu0 %v510
    %704 = vmatprep.subr.bf16.mxu0 0
    %705 = vmatpush1.bf16.msra.mxu0 %v511
    %706 = vmatprep.mubr.bf16.mxu0 %v70
    %707 = vmatmul.mubr.bf16.gmra.mrb[0].mxu0 %v69
    %v708 = vpop.f32.mrb[0].mxu0
    %v709 = vadd.f32 %v668, %v708
    %v710 = vpop.f32.mrb[0].mxu0
    %v711 = vpop.f32.mrb[0].mxu0
    %v712 = vadd.f32 %v671, %v711
    %v713 = vpop.f32.mrb[0].mxu0
    %714 = vdwg.mxu0
    %715 = vmatprep.subr.bf16.mxu0 0
    %716 = vmatpush1.bf16.msra.mxu0 %v512
    %717 = vmatprep.subr.bf16.mxu0 0
    %718 = vmatpush1.bf16.msra.mxu0 %v513
    %719 = vmatprep.subr.bf16.mxu0 0
    %720 = vmatpush1.bf16.msra.mxu0 %v514
    %721 = vmatprep.subr.bf16.mxu0 0
    %722 = vmatpush1.bf16.msra.mxu0 %v515
    %723 = vmatprep.subr.bf16.mxu0 0
    %724 = vmatpush1.bf16.msra.mxu0 %v516
    %725 = vmatprep.subr.bf16.mxu0 0
    %726 = vmatpush1.bf16.msra.mxu0 %v517
    %727 = vmatprep.subr.bf16.mxu0 0
    %728 = vmatpush1.bf16.msra.mxu0 %v518
    %729 = vmatprep.subr.bf16.mxu0 0
    %730 = vmatpush1.bf16.msra.mxu0 %v519
    %731 = vmatprep.subr.bf16.mxu0 0
    %732 = vmatpush1.bf16.msra.mxu0 %v520
    %733 = vmatprep.subr.bf16.mxu0 0
    %734 = vmatpush1.bf16.msra.mxu0 %v521
    %735 = vmatprep.subr.bf16.mxu0 0
    %736 = vmatpush1.bf16.msra.mxu0 %v522
    %737 = vmatprep.subr.bf16.mxu0 0
    %738 = vmatpush1.bf16.msra.mxu0 %v523
    %739 = vmatprep.subr.bf16.mxu0 0
    %740 = vmatpush1.bf16.msra.mxu0 %v524
    %741 = vmatprep.subr.bf16.mxu0 0
    %742 = vmatpush1.bf16.msra.mxu0 %v525
    %743 = vmatprep.subr.bf16.mxu0 0
    %744 = vmatpush1.bf16.msra.mxu0 %v526
    %745 = vmatprep.subr.bf16.mxu0 0
    %746 = vmatpush1.bf16.msra.mxu0 %v527
    %747 = vmatprep.mubr.bf16.mxu0 %v72
    %748 = vmatmul.mubr.bf16.gmra.mrb[0].mxu0 %v71
    %v749 = vpop.f32.mrb[0].mxu0
    %v750 = vadd.f32 %v709, %v749
    %v751 = vpop.f32.mrb[0].mxu0
    %v752 = vpop.f32.mrb[0].mxu0
    %v753 = vadd.f32 %v712, %v752
    %v754 = vpop.f32.mrb[0].mxu0
    %755 = vdwg.mxu0
    %v756 = vmax.f32 %v750, 0.0
    %v757 = vmax.f32 %v753, 0.0
    %v758 = vpack.c.bf16 %v757, %v756
    %v759 = vld [vmem:[#allocation4] sm:$0xff]
    %v760 = vld [vmem:[#allocation4 + $0x8] sm:$0xff]
    %v761 = vld [vmem:[#allocation4 + $0x10] sm:$0xff]
    %v762 = vld [vmem:[#allocation4 + $0x18] sm:$0xff]
    %v763 = vld [vmem:[#allocation4 + $0x20] sm:$0xff]
    %v764 = vld [vmem:[#allocation4 + $0x28] sm:$0xff]
    %v765 = vld [vmem:[#allocation4 + $0x30] sm:$0xff]
    %v766 = vld [vmem:[#allocation4 + $0x38] sm:$0xff]
    %v767 = vld [vmem:[#allocation4 + $0x40] sm:$0xff]
    %v768 = vld [vmem:[#allocation4 + $0x48] sm:$0xff]
    %v769 = vld [vmem:[#allocation4 + $0x50] sm:$0xff]
    %v770 = vld [vmem:[#allocation4 + $0x58] sm:$0xff]
    %v771 = vld [vmem:[#allocation4 + $0x60] sm:$0xff]
    %v772 = vld [vmem:[#allocation4 + $0x68] sm:$0xff]
    %v773 = vld [vmem:[#allocation4 + $0x70] sm:$0xff]
    %v774 = vld [vmem:[#allocation4 + $0x78] sm:$0xff]
    %v775 = vld [vmem:[#allocation4 + $0x80] sm:$0xff]
    %v776 = vld [vmem:[#allocation4 + $0x88] sm:$0xff]
    %v777 = vld [vmem:[#allocation4 + $0x90] sm:$0xff]
    %v778 = vld [vmem:[#allocation4 + $0x98] sm:$0xff]
    %v779 = vld [vmem:[#allocation4 + $0xa0] sm:$0xff]
    %v780 = vld [vmem:[#allocation4 + $0xa8] sm:$0xff]
    %v781 = vld [vmem:[#allocation4 + $0xb0] sm:$0xff]
    %v782 = vld [vmem:[#allocation4 + $0xb8] sm:$0xff]
    %v783 = vld [vmem:[#allocation4 + $0xc0] sm:$0xff]
    %v784 = vld [vmem:[#allocation4 + $0xc8] sm:$0xff]
    %v785 = vld [vmem:[#allocation4 + $0xd0] sm:$0xff]
    %v786 = vld [vmem:[#allocation4 + $0xd8] sm:$0xff]
    %v787 = vld [vmem:[#allocation4 + $0xe0] sm:$0xff]
    %v788 = vld [vmem:[#allocation4 + $0xe8] sm:$0xff]
    %v789 = vld [vmem:[#allocation4 + $0xf0] sm:$0xff]
    %v790 = vld [vmem:[#allocation4 + $0xf8] sm:$0xff]
    %v791 = vld [vmem:[#allocation4 + $0x100] sm:$0xff]
    %v792 = vld [vmem:[#allocation4 + $0x108] sm:$0xff]
    %v793 = vld [vmem:[#allocation4 + $0x110] sm:$0xff]
    %v794 = vld [vmem:[#allocation4 + $0x118] sm:$0xff]
    %v795 = vld [vmem:[#allocation4 + $0x120] sm:$0xff]
    %v796 = vld [vmem:[#allocation4 + $0x128] sm:$0xff]
    %v797 = vld [vmem:[#allocation4 + $0x130] sm:$0xff]
    %v798 = vld [vmem:[#allocation4 + $0x138] sm:$0xff]
    %v799 = vld [vmem:[#allocation4 + $0x140] sm:$0xff]
    %v800 = vld [vmem:[#allocation4 + $0x148] sm:$0xff]
    %v801 = vld [vmem:[#allocation4 + $0x150] sm:$0xff]
    %v802 = vld [vmem:[#allocation4 + $0x158] sm:$0xff]
    %v803 = vld [vmem:[#allocation4 + $0x160] sm:$0xff]
    %v804 = vld [vmem:[#allocation4 + $0x168] sm:$0xff]
    %v805 = vld [vmem:[#allocation4 + $0x170] sm:$0xff]
    %v806 = vld [vmem:[#allocation4 + $0x178] sm:$0xff]
    %v807 = vld [vmem:[#allocation4 + $0x180] sm:$0xff]
    %v808 = vld [vmem:[#allocation4 + $0x188] sm:$0xff]
    %v809 = vld [vmem:[#allocation4 + $0x190] sm:$0xff]
    %v810 = vld [vmem:[#allocation4 + $0x198] sm:$0xff]
    %v811 = vld [vmem:[#allocation4 + $0x1a0] sm:$0xff]
    %v812 = vld [vmem:[#allocation4 + $0x1a8] sm:$0xff]
    %v813 = vld [vmem:[#allocation4 + $0x1b0] sm:$0xff]
    %v814 = vld [vmem:[#allocation4 + $0x1b8] sm:$0xff]
    %v815 = vld [vmem:[#allocation4 + $0x1c0] sm:$0xff]
    %v816 = vld [vmem:[#allocation4 + $0x1c8] sm:$0xff]
    %v817 = vld [vmem:[#allocation4 + $0x1d0] sm:$0xff]
    %v818 = vld [vmem:[#allocation4 + $0x1d8] sm:$0xff]
    %v819 = vld [vmem:[#allocation4 + $0x1e0] sm:$0xff]
    %v820 = vld [vmem:[#allocation4 + $0x1e8] sm:$0xff]
    %v821 = vld [vmem:[#allocation4 + $0x1f0] sm:$0xff]
    %v822 = vld [vmem:[#allocation4 + $0x1f8] sm:$0xff]
    %v823 = vld [vmem:[%s4] sm:$0xff]
    %v825 = vlaneseq
    %v826 = vshrl.u32 %v825, 7
    %v827 = vsub.s32 0, %v826
    %v828 = vrot.slane %v823, %v827
    %v829 = vlaneseq
    %v830 = vshrl.u32 %v829, 7
    %v831 = vsub.s32 1, %v830
    %v832 = vrot.slane %v823, %v831
    %v833 = vlaneseq
    %v834 = vshrl.u32 %v833, 7
    %v835 = vsub.s32 2, %v834
    %v836 = vrot.slane %v823, %v835
    %v837 = vlaneseq
    %v838 = vshrl.u32 %v837, 7
    %v839 = vsub.s32 3, %v838
    %v840 = vrot.slane %v823, %v839
    %v841 = vlaneseq
    %v842 = vshrl.u32 %v841, 7
    %v843 = vsub.s32 4, %v842
    %v844 = vrot.slane %v823, %v843
    %v845 = vlaneseq
    %v846 = vshrl.u32 %v845, 7
    %v847 = vsub.s32 5, %v846
    %v848 = vrot.slane %v823, %v847
    %v849 = vlaneseq
    %v850 = vshrl.u32 %v849, 7
    %v851 = vsub.s32 6, %v850
    %v852 = vrot.slane %v823, %v851
    %v853 = vlaneseq
    %v854 = vshrl.u32 %v853, 7
    %v855 = vsub.s32 7, %v854
    %v856 = vrot.slane %v823, %v855
    %v929 = vunpack.c.l.b16 %v759
    %v930 = vunpack.c.h.b16 %v759
    %v931 = vunpack.c.l.b16 %v760
    %v932 = vunpack.c.h.b16 %v760
    %v933 = vunpack.c.l.b16 %v761
    %v934 = vunpack.c.h.b16 %v761
    %v935 = vunpack.c.l.b16 %v762
    %v936 = vunpack.c.h.b16 %v762
    %v937 = vunpack.c.l.b16 %v763
    %v938 = vunpack.c.h.b16 %v763
    %v939 = vunpack.c.l.b16 %v764
    %v940 = vunpack.c.h.b16 %v764
    %v941 = vunpack.c.l.b16 %v765
    %v942 = vunpack.c.h.b16 %v765
    %v943 = vunpack.c.l.b16 %v766
    %v944 = vunpack.c.h.b16 %v766
    %v945 = vunpack.c.l.b16 %v767
    %v946 = vunpack.c.h.b16 %v767
    %v947 = vunpack.c.l.b16 %v768
    %v948 = vunpack.c.h.b16 %v768
    %v949 = vunpack.c.l.b16 %v769
    %v950 = vunpack.c.h.b16 %v769
    %v951 = vunpack.c.l.b16 %v770
    %v952 = vunpack.c.h.b16 %v770
    %v953 = vunpack.c.l.b16 %v771
    %v954 = vunpack.c.h.b16 %v771
    %v955 = vunpack.c.l.b16 %v772
    %v956 = vunpack.c.h.b16 %v772
    %v957 = vunpack.c.l.b16 %v773
    %v958 = vunpack.c.h.b16 %v773
    %v959 = vunpack.c.l.b16 %v774
    %v960 = vunpack.c.h.b16 %v774
    %v961 = vunpack.c.l.b16 %v775
    %v962 = vunpack.c.h.b16 %v775
    %v963 = vunpack.c.l.b16 %v776
    %v964 = vunpack.c.h.b16 %v776
    %v965 = vunpack.c.l.b16 %v777
    %v966 = vunpack.c.h.b16 %v777
    %v967 = vunpack.c.l.b16 %v778
    %v968 = vunpack.c.h.b16 %v778
    %v969 = vunpack.c.l.b16 %v779
    %v970 = vunpack.c.h.b16 %v779
    %v971 = vunpack.c.l.b16 %v780
    %v972 = vunpack.c.h.b16 %v780
    %v973 = vunpack.c.l.b16 %v781
    %v974 = vunpack.c.h.b16 %v781
    %v975 = vunpack.c.l.b16 %v782
    %v976 = vunpack.c.h.b16 %v782
    %v977 = vunpack.c.l.b16 %v783
    %v978 = vunpack.c.h.b16 %v783
    %v979 = vunpack.c.l.b16 %v784
    %v980 = vunpack.c.h.b16 %v784
    %v981 = vunpack.c.l.b16 %v785
    %v982 = vunpack.c.h.b16 %v785
    %v983 = vunpack.c.l.b16 %v786
    %v984 = vunpack.c.h.b16 %v786
    %v985 = vunpack.c.l.b16 %v787
    %v986 = vunpack.c.h.b16 %v787
    %v987 = vunpack.c.l.b16 %v788
    %v988 = vunpack.c.h.b16 %v788
    %v989 = vunpack.c.l.b16 %v789
    %v990 = vunpack.c.h.b16 %v789
    %v991 = vunpack.c.l.b16 %v790
    %v992 = vunpack.c.h.b16 %v790
    %v993 = vunpack.c.l.b16 %v791
    %v994 = vunpack.c.h.b16 %v791
    %v995 = vunpack.c.l.b16 %v792
    %v996 = vunpack.c.h.b16 %v792
    %v997 = vunpack.c.l.b16 %v793
    %v998 = vunpack.c.h.b16 %v793
    %v999 = vunpack.c.l.b16 %v794
    %v1000 = vunpack.c.h.b16 %v794
    %v1001 = vunpack.c.l.b16 %v795
    %v1002 = vunpack.c.h.b16 %v795
    %v1003 = vunpack.c.l.b16 %v796
    %v1004 = vunpack.c.h.b16 %v796
    %v1005 = vunpack.c.l.b16 %v797
    %v1006 = vunpack.c.h.b16 %v797
    %v1007 = vunpack.c.l.b16 %v798
    %v1008 = vunpack.c.h.b16 %v798
    %v1009 = vunpack.c.l.b16 %v799
    %v1010 = vunpack.c.h.b16 %v799
    %v1011 = vunpack.c.l.b16 %v800
    %v1012 = vunpack.c.h.b16 %v800
    %v1013 = vunpack.c.l.b16 %v801
    %v1014 = vunpack.c.h.b16 %v801
    %v1015 = vunpack.c.l.b16 %v802
    %v1016 = vunpack.c.h.b16 %v802
    %v1017 = vunpack.c.l.b16 %v803
    %v1018 = vunpack.c.h.b16 %v803
    %v1019 = vunpack.c.l.b16 %v804
    %v1020 = vunpack.c.h.b16 %v804
    %v1021 = vunpack.c.l.b16 %v805
    %v1022 = vunpack.c.h.b16 %v805
    %v1023 = vunpack.c.l.b16 %v806
    %v1024 = vunpack.c.h.b16 %v806
    %v1025 = vunpack.c.l.b16 %v807
    %v1026 = vunpack.c.h.b16 %v807
    %v1027 = vunpack.c.l.b16 %v808
    %v1028 = vunpack.c.h.b16 %v808
    %v1029 = vunpack.c.l.b16 %v809
    %v1030 = vunpack.c.h.b16 %v809
    %v1031 = vunpack.c.l.b16 %v810
    %v1032 = vunpack.c.h.b16 %v810
    %v1033 = vunpack.c.l.b16 %v811
    %v1034 = vunpack.c.h.b16 %v811
    %v1035 = vunpack.c.l.b16 %v812
    %v1036 = vunpack.c.h.b16 %v812
    %v1037 = vunpack.c.l.b16 %v813
    %v1038 = vunpack.c.h.b16 %v813
    %v1039 = vunpack.c.l.b16 %v814
    %v1040 = vunpack.c.h.b16 %v814
    %v1041 = vunpack.c.l.b16 %v815
    %v1042 = vunpack.c.h.b16 %v815
    %v1043 = vunpack.c.l.b16 %v816
    %v1044 = vunpack.c.h.b16 %v816
    %v1045 = vunpack.c.l.b16 %v817
    %v1046 = vunpack.c.h.b16 %v817
    %v1047 = vunpack.c.l.b16 %v818
    %v1048 = vunpack.c.h.b16 %v818
    %v1049 = vunpack.c.l.b16 %v819
    %v1050 = vunpack.c.h.b16 %v819
    %v1051 = vunpack.c.l.b16 %v820
    %v1052 = vunpack.c.h.b16 %v820
    %v1053 = vunpack.c.l.b16 %v821
    %v1054 = vunpack.c.h.b16 %v821
    %v1055 = vunpack.c.l.b16 %v822
    %v1056 = vunpack.c.h.b16 %v822
    %v1057 = vpack.c.b16 %v937, %v929
    %v1058 = vpack.c.b16 %v938, %v930
    %v1059 = vpack.c.b16 %v939, %v931
    %v1060 = vpack.c.b16 %v940, %v932
    %v1061 = vpack.c.b16 %v941, %v933
    %v1062 = vpack.c.b16 %v942, %v934
    %v1063 = vpack.c.b16 %v943, %v935
    %v1064 = vpack.c.b16 %v944, %v936
    %v1065 = vpack.c.b16 %v953, %v945
    %v1066 = vpack.c.b16 %v954, %v946
    %v1067 = vpack.c.b16 %v955, %v947
    %v1068 = vpack.c.b16 %v956, %v948
    %v1069 = vpack.c.b16 %v957, %v949
    %v1070 = vpack.c.b16 %v958, %v950
    %v1071 = vpack.c.b16 %v959, %v951
    %v1072 = vpack.c.b16 %v960, %v952
    %v1073 = vpack.c.b16 %v969, %v961
    %v1074 = vpack.c.b16 %v970, %v962
    %v1075 = vpack.c.b16 %v971, %v963
    %v1076 = vpack.c.b16 %v972, %v964
    %v1077 = vpack.c.b16 %v973, %v965
    %v1078 = vpack.c.b16 %v974, %v966
    %v1079 = vpack.c.b16 %v975, %v967
    %v1080 = vpack.c.b16 %v976, %v968
    %v1081 = vpack.c.b16 %v985, %v977
    %v1082 = vpack.c.b16 %v986, %v978
    %v1083 = vpack.c.b16 %v987, %v979
    %v1084 = vpack.c.b16 %v988, %v980
    %v1085 = vpack.c.b16 %v989, %v981
    %v1086 = vpack.c.b16 %v990, %v982
    %v1087 = vpack.c.b16 %v991, %v983
    %v1088 = vpack.c.b16 %v992, %v984
    %v1089 = vpack.c.b16 %v1001, %v993
    %v1090 = vpack.c.b16 %v1002, %v994
    %v1091 = vpack.c.b16 %v1003, %v995
    %v1092 = vpack.c.b16 %v1004, %v996
    %v1093 = vpack.c.b16 %v1005, %v997
    %v1094 = vpack.c.b16 %v1006, %v998
    %v1095 = vpack.c.b16 %v1007, %v999
    %v1096 = vpack.c.b16 %v1008, %v1000
    %v1097 = vpack.c.b16 %v1017, %v1009
    %v1098 = vpack.c.b16 %v1018, %v1010
    %v1099 = vpack.c.b16 %v1019, %v1011
    %v1100 = vpack.c.b16 %v1020, %v1012
    %v1101 = vpack.c.b16 %v1021, %v1013
    %v1102 = vpack.c.b16 %v1022, %v1014
    %v1103 = vpack.c.b16 %v1023, %v1015
    %v1104 = vpack.c.b16 %v1024, %v1016
    %v1105 = vpack.c.b16 %v1033, %v1025
    %v1106 = vpack.c.b16 %v1034, %v1026
    %v1107 = vpack.c.b16 %v1035, %v1027
    %v1108 = vpack.c.b16 %v1036, %v1028
    %v1109 = vpack.c.b16 %v1037, %v1029
    %v1110 = vpack.c.b16 %v1038, %v1030
    %v1111 = vpack.c.b16 %v1039, %v1031
    %v1112 = vpack.c.b16 %v1040, %v1032
    %v1113 = vpack.c.b16 %v1049, %v1041
    %v1114 = vpack.c.b16 %v1050, %v1042
    %v1115 = vpack.c.b16 %v1051, %v1043
    %v1116 = vpack.c.b16 %v1052, %v1044
    %v1117 = vpack.c.b16 %v1053, %v1045
    %v1118 = vpack.c.b16 %v1054, %v1046
    %v1119 = vpack.c.b16 %v1055, %v1047
    %v1120 = vpack.c.b16 %v1056, %v1048
    %1185 = vmatprep.subr.bf16.mxu0 %v1058
    %1186 = vmatpush1.bf16.msra.mxu0 %v1057
    %1187 = vmatprep.subr.bf16.mxu0 %v1066
    %1188 = vmatpush1.bf16.msra.mxu0 %v1065
    %1189 = vmatprep.subr.bf16.mxu0 %v1074
    %1190 = vmatpush1.bf16.msra.mxu0 %v1073
    %1191 = vmatprep.subr.bf16.mxu0 %v1082
    %1192 = vmatpush1.bf16.msra.mxu0 %v1081
    %1193 = vmatprep.subr.bf16.mxu0 %v1090
    %1194 = vmatpush1.bf16.msra.mxu0 %v1089
    %1195 = vmatprep.subr.bf16.mxu0 %v1098
    %1196 = vmatpush1.bf16.msra.mxu0 %v1097
    %1197 = vmatprep.subr.bf16.mxu0 %v1106
    %1198 = vmatpush1.bf16.msra.mxu0 %v1105
    %1199 = vmatprep.subr.bf16.mxu0 %v1114
    %1200 = vmatpush1.bf16.msra.mxu0 %v1113
    %1201 = vmatprep.subr.bf16.mxu0 0
    %1202 = vmatpush1.bf16.msra.mxu0 0
    %1203 = vmatprep.subr.bf16.mxu0 0
    %1204 = vmatpush1.bf16.msra.mxu0 0
    %1205 = vmatprep.subr.bf16.mxu0 0
    %1206 = vmatpush1.bf16.msra.mxu0 0
    %1207 = vmatprep.subr.bf16.mxu0 0
    %1208 = vmatpush1.bf16.msra.mxu0 0
    %1209 = vmatprep.subr.bf16.mxu0 0
    %1210 = vmatpush1.bf16.msra.mxu0 0
    %1211 = vmatprep.subr.bf16.mxu0 0
    %1212 = vmatpush1.bf16.msra.mxu0 0
    %1213 = vmatprep.subr.bf16.mxu0 0
    %1214 = vmatpush1.bf16.msra.mxu0 0
    %1215 = vmatprep.subr.bf16.mxu0 0
    %1216 = vmatpush1.bf16.msra.mxu0 0
    %1217 = vmatprep.mubr.bf16.mxu0 0
    %1218 = vmatmul.mubr.bf16.gmra.mrb[0].mxu0 %v758
    %v1219 = vpop.f32.mrb[0].mxu0
    %v1220 = vadd.f32 %v828, %v1219
    %v1221 = vpop.f32.mrb[0].mxu0
    %v1222 = vadd.f32 %v832, %v1221
    %v1223 = vpop.f32.mrb[0].mxu0
    %v1224 = vadd.f32 %v828, %v1223
    %v1225 = vpop.f32.mrb[0].mxu0
    %v1226 = vadd.f32 %v832, %v1225
    %1227 = vdwg.mxu0
    %1228 = vmatprep.subr.bf16.mxu0 %v1060
    %1229 = vmatpush1.bf16.msra.mxu0 %v1059
    %1230 = vmatprep.subr.bf16.mxu0 %v1068
    %1231 = vmatpush1.bf16.msra.mxu0 %v1067
    %1232 = vmatprep.subr.bf16.mxu0 %v1076
    %1233 = vmatpush1.bf16.msra.mxu0 %v1075
    %1234 = vmatprep.subr.bf16.mxu0 %v1084
    %1235 = vmatpush1.bf16.msra.mxu0 %v1083
    %1236 = vmatprep.subr.bf16.mxu0 %v1092
    %1237 = vmatpush1.bf16.msra.mxu0 %v1091
    %1238 = vmatprep.subr.bf16.mxu0 %v1100
    %1239 = vmatpush1.bf16.msra.mxu0 %v1099
    %1240 = vmatprep.subr.bf16.mxu0 %v1108
    %1241 = vmatpush1.bf16.msra.mxu0 %v1107
    %1242 = vmatprep.subr.bf16.mxu0 %v1116
    %1243 = vmatpush1.bf16.msra.mxu0 %v1115
    %1244 = vmatprep.subr.bf16.mxu0 0
    %1245 = vmatpush1.bf16.msra.mxu0 0
    %1246 = vmatprep.subr.bf16.mxu0 0
    %1247 = vmatpush1.bf16.msra.mxu0 0
    %1248 = vmatprep.subr.bf16.mxu0 0
    %1249 = vmatpush1.bf16.msra.mxu0 0
    %1250 = vmatprep.subr.bf16.mxu0 0
    %1251 = vmatpush1.bf16.msra.mxu0 0
    %1252 = vmatprep.subr.bf16.mxu0 0
    %1253 = vmatpush1.bf16.msra.mxu0 0
    %1254 = vmatprep.subr.bf16.mxu0 0
    %1255 = vmatpush1.bf16.msra.mxu0 0
    %1256 = vmatprep.subr.bf16.mxu0 0
    %1257 = vmatpush1.bf16.msra.mxu0 0
    %1258 = vmatprep.subr.bf16.mxu0 0
    %1259 = vmatpush1.bf16.msra.mxu0 0
    %1260 = vmatprep.mubr.bf16.mxu0 0
    %1261 = vmatmul.mubr.bf16.gmra.mrb[0].mxu0 %v758
    %v1262 = vpop.f32.mrb[0].mxu0
    %v1263 = vadd.f32 %v836, %v1262
    %v1264 = vpop.f32.mrb[0].mxu0
    %v1265 = vadd.f32 %v840, %v1264
    %v1266 = vpop.f32.mrb[0].mxu0
    %v1267 = vadd.f32 %v836, %v1266
    %v1268 = vpop.f32.mrb[0].mxu0
    %v1269 = vadd.f32 %v840, %v1268
    %1270 = vdwg.mxu0
    %1271 = vmatprep.subr.bf16.mxu0 %v1062
    %1272 = vmatpush1.bf16.msra.mxu0 %v1061
    %1273 = vmatprep.subr.bf16.mxu0 %v1070
    %1274 = vmatpush1.bf16.msra.mxu0 %v1069
    %1275 = vmatprep.subr.bf16.mxu0 %v1078
    %1276 = vmatpush1.bf16.msra.mxu0 %v1077
    %1277 = vmatprep.subr.bf16.mxu0 %v1086
    %1278 = vmatpush1.bf16.msra.mxu0 %v1085
    %1279 = vmatprep.subr.bf16.mxu0 %v1094
    %1280 = vmatpush1.bf16.msra.mxu0 %v1093
    %1281 = vmatprep.subr.bf16.mxu0 %v1102
    %1282 = vmatpush1.bf16.msra.mxu0 %v1101
    %1283 = vmatprep.subr.bf16.mxu0 %v1110
    %1284 = vmatpush1.bf16.msra.mxu0 %v1109
    %1285 = vmatprep.subr.bf16.mxu0 %v1118
    %1286 = vmatpush1.bf16.msra.mxu0 %v1117
    %1287 = vmatprep.subr.bf16.mxu0 0
    %1288 = vmatpush1.bf16.msra.mxu0 0
    %1289 = vmatprep.subr.bf16.mxu0 0
    %1290 = vmatpush1.bf16.msra.mxu0 0
    %1291 = vmatprep.subr.bf16.mxu0 0
    %1292 = vmatpush1.bf16.msra.mxu0 0
    %1293 = vmatprep.subr.bf16.mxu0 0
    %1294 = vmatpush1.bf16.msra.mxu0 0
    %1295 = vmatprep.subr.bf16.mxu0 0
    %1296 = vmatpush1.bf16.msra.mxu0 0
    %1297 = vmatprep.subr.bf16.mxu0 0
    %1298 = vmatpush1.bf16.msra.mxu0 0
    %1299 = vmatprep.subr.bf16.mxu0 0
    %1300 = vmatpush1.bf16.msra.mxu0 0
    %1301 = vmatprep.subr.bf16.mxu0 0
    %1302 = vmatpush1.bf16.msra.mxu0 0
    %1303 = vmatprep.mubr.bf16.mxu0 0
    %1304 = vmatmul.mubr.bf16.gmra.mrb[0].mxu0 %v758
    %v1305 = vpop.f32.mrb[0].mxu0
    %v1306 = vadd.f32 %v844, %v1305
    %v1307 = vpop.f32.mrb[0].mxu0
    %v1308 = vadd.f32 %v848, %v1307
    %v1309 = vpop.f32.mrb[0].mxu0
    %v1310 = vadd.f32 %v844, %v1309
    %v1311 = vpop.f32.mrb[0].mxu0
    %v1312 = vadd.f32 %v848, %v1311
    %1313 = vdwg.mxu0
    %1314 = vmatprep.subr.bf16.mxu0 %v1064
    %1315 = vmatpush1.bf16.msra.mxu0 %v1063
    %1316 = vmatprep.subr.bf16.mxu0 %v1072
    %1317 = vmatpush1.bf16.msra.mxu0 %v1071
    %1318 = vmatprep.subr.bf16.mxu0 %v1080
    %1319 = vmatpush1.bf16.msra.mxu0 %v1079
    %1320 = vmatprep.subr.bf16.mxu0 %v1088
    %1321 = vmatpush1.bf16.msra.mxu0 %v1087
    %1322 = vmatprep.subr.bf16.mxu0 %v1096
    %1323 = vmatpush1.bf16.msra.mxu0 %v1095
    %1324 = vmatprep.subr.bf16.mxu0 %v1104
    %1325 = vmatpush1.bf16.msra.mxu0 %v1103
    %1326 = vmatprep.subr.bf16.mxu0 %v1112
    %1327 = vmatpush1.bf16.msra.mxu0 %v1111
    %1328 = vmatprep.subr.bf16.mxu0 %v1120
    %1329 = vmatpush1.bf16.msra.mxu0 %v1119
    %1330 = vmatprep.subr.bf16.mxu0 0
    %1331 = vmatpush1.bf16.msra.mxu0 0
    %1332 = vmatprep.subr.bf16.mxu0 0
    %1333 = vmatpush1.bf16.msra.mxu0 0
    %1334 = vmatprep.subr.bf16.mxu0 0
    %1335 = vmatpush1.bf16.msra.mxu0 0
    %1336 = vmatprep.subr.bf16.mxu0 0
    %1337 = vmatpush1.bf16.msra.mxu0 0
    %1338 = vmatprep.subr.bf16.mxu0 0
    %1339 = vmatpush1.bf16.msra.mxu0 0
    %1340 = vmatprep.subr.bf16.mxu0 0
    %1341 = vmatpush1.bf16.msra.mxu0 0
    %1342 = vmatprep.subr.bf16.mxu0 0
    %1343 = vmatpush1.bf16.msra.mxu0 0
    %1344 = vmatprep.subr.bf16.mxu0 0
    %1345 = vmatpush1.bf16.msra.mxu0 0
    %1346 = vmatprep.mubr.bf16.mxu0 0
    %1347 = vmatmul.mubr.bf16.gmra.mrb[0].mxu0 %v758
    %v1348 = vpop.f32.mrb[0].mxu0
    %v1349 = vadd.f32 %v852, %v1348
    %v1350 = vpop.f32.mrb[0].mxu0
    %v1351 = vadd.f32 %v856, %v1350
    %v1352 = vpop.f32.mrb[0].mxu0
    %v1353 = vadd.f32 %v852, %v1352
    %v1354 = vpop.f32.mrb[0].mxu0
    %v1355 = vadd.f32 %v856, %v1354
    %1356 = vdwg.mxu0
    %v1357 = vsub.f32 0.0, %v1220
    %v1358 = vsub.f32 0.0, %v1222
    %v1359 = vsub.f32 0.0, %v1263
    %v1360 = vsub.f32 0.0, %v1265
    %v1361 = vsub.f32 0.0, %v1306
    %v1362 = vsub.f32 0.0, %v1308
    %v1363 = vsub.f32 0.0, %v1349
    %v1364 = vsub.f32 0.0, %v1351
    %v1365 = vsub.f32 0.0, %v1224
    %v1366 = vsub.f32 0.0, %v1226
    %v1367 = vsub.f32 0.0, %v1267
    %v1368 = vsub.f32 0.0, %v1269
    %v1369 = vsub.f32 0.0, %v1310
    %v1370 = vsub.f32 0.0, %v1312
    %v1371 = vsub.f32 0.0, %v1353
    %v1372 = vsub.f32 0.0, %v1355
    %v1373 = vmul.f32 %v1357, 1.442695
    %v1374 = vpow.pop %v1373
    %v1375 = vmul.f32 %v1358, 1.442695
    %v1376 = vpow.pop %v1375
    %v1377 = vmul.f32 %v1359, 1.442695
    %v1378 = vpow.pop %v1377
    %v1379 = vmul.f32 %v1360, 1.442695
    %v1380 = vpow.pop %v1379
    %v1381 = vmul.f32 %v1361, 1.442695
    %v1382 = vpow.pop %v1381
    %v1383 = vmul.f32 %v1362, 1.442695
    %v1384 = vpow.pop %v1383
    %v1385 = vmul.f32 %v1363, 1.442695
    %v1386 = vpow.pop %v1385
    %v1387 = vmul.f32 %v1364, 1.442695
    %v1388 = vpow.pop %v1387
    %v1389 = vmul.f32 %v1365, 1.442695
    %v1390 = vpow.pop %v1389
    %v1391 = vmul.f32 %v1366, 1.442695
    %v1392 = vpow.pop %v1391
    %v1393 = vmul.f32 %v1367, 1.442695
    %v1394 = vpow.pop %v1393
    %v1395 = vmul.f32 %v1368, 1.442695
    %v1396 = vpow.pop %v1395
    %v1397 = vmul.f32 %v1369, 1.442695
    %v1398 = vpow.pop %v1397
    %v1399 = vmul.f32 %v1370, 1.442695
    %v1400 = vpow.pop %v1399
    %v1401 = vmul.f32 %v1371, 1.442695
    %v1402 = vpow.pop %v1401
    %v1403 = vmul.f32 %v1372, 1.442695
    %v1404 = vpow.pop %v1403
    %v1405 = vadd.f32 %v1374, 1.0
    %v1406 = vadd.f32 %v1376, 1.0
    %v1407 = vadd.f32 %v1378, 1.0
    %v1408 = vadd.f32 %v1380, 1.0
    %v1409 = vadd.f32 %v1382, 1.0
    %v1410 = vadd.f32 %v1384, 1.0
    %v1411 = vadd.f32 %v1386, 1.0
    %v1412 = vadd.f32 %v1388, 1.0
    %v1413 = vadd.f32 %v1390, 1.0
    %v1414 = vadd.f32 %v1392, 1.0
    %v1415 = vadd.f32 %v1394, 1.0
    %v1416 = vadd.f32 %v1396, 1.0
    %v1417 = vadd.f32 %v1398, 1.0
    %v1418 = vadd.f32 %v1400, 1.0
    %v1419 = vadd.f32 %v1402, 1.0
    %v1420 = vadd.f32 %v1404, 1.0
    %v1421 = vrcp.pop %v1405
    %v1422 = vrcp.pop %v1406
    %v1423 = vrcp.pop %v1407
    %v1424 = vrcp.pop %v1408
    %v1425 = vrcp.pop %v1409
    %v1426 = vrcp.pop %v1410
    %v1427 = vrcp.pop %v1411
    %v1428 = vrcp.pop %v1412
    %v1429 = vrcp.pop %v1413
    %v1430 = vrcp.pop %v1414
    %v1431 = vrcp.pop %v1415
    %v1432 = vrcp.pop %v1416
    %v1433 = vrcp.pop %v1417
    %v1434 = vrcp.pop %v1418
    %v1435 = vrcp.pop %v1419
    %v1436 = vrcp.pop %v1420
    %1437 = vst [vmem:[%s5] sm:$0xff] %v1421
    %1438 = vst [vmem:[%s5 + $0x8] sm:$0xff] %v1422
    %1439 = vst [vmem:[%s5 + $0x10] sm:$0xff] %v1423
    %1440 = vst [vmem:[%s5 + $0x18] sm:$0xff] %v1424
    %1441 = vst [vmem:[%s5 + $0x20] sm:$0xff] %v1425
    %1442 = vst [vmem:[%s5 + $0x28] sm:$0xff] %v1426
    %1443 = vst [vmem:[%s5 + $0x30] sm:$0xff] %v1427
    %1444 = vst [vmem:[%s5 + $0x38] sm:$0xff] %v1428
    %1445 = vst [vmem:[%s5 + $0x40] sm:$0xff] %v1429
    %1446 = vst [vmem:[%s5 + $0x48] sm:$0xff] %v1430
    %1447 = vst [vmem:[%s5 + $0x50] sm:$0xff] %v1431
    %1448 = vst [vmem:[%s5 + $0x58] sm:$0xff] %v1432
    %1449 = vst [vmem:[%s5 + $0x60] sm:$0xff] %v1433
    %1450 = vst [vmem:[%s5 + $0x68] sm:$0xff] %v1434
    %1451 = vst [vmem:[%s5 + $0x70] sm:$0xff] %v1435
    %1452 = vst [vmem:[%s5 + $0x78] sm:$0xff] %v1436
    // Predicated region
    $region30: #{autoencoder_forward.1} parent=1 // pred_check
      _
    $region31: #{autoencoder_forward.1} parent=1 // pred_check_branch
      %1454 = sbr.rel (0) target = $region33
    $region32: #{autoencoder_forward.1} parent=1 // pred_region
      _
    $region33: #{autoencoder_forward.1} parent=1 // pred_fallthru
      _
    // Predicated region
    $region34: #{autoencoder_forward.1} parent=1 // pred_check
      _
    $region35: #{autoencoder_forward.1} parent=1 // pred_check_branch
      %1456 = sbr.rel (0) target = $region37
    $region36: #{autoencoder_forward.1} parent=1 // pred_region
      _
    $region37: #{autoencoder_forward.1} parent=1 // pred_fallthru
      _
    %1457 = vsyncpa [#allocation3], 1
    %1458 = vsyncpa [#allocation5], 1

</llo_original>
